<compile_context>
chip_gen: v6e
topology: v6e:2x2x1
jax: 0.10.0
libtpu: 0.0.40
codegen_flags: <defaults>
</compile_context>

<pallas_src>
import functools

import jax
import jax.numpy as jnp
from jax.experimental import pallas as pl
from jax.experimental.pallas import tpu as pltpu

_LANE = 128      # vreg lane width
_SUBLANE = 8     # f32 sublane count


def _round_up(n, m):
    return (n + m - 1) // m * m


def _mlp_kernel(x_ref, w1_ref, b1_ref, w2_ref, b2_ref, o_ref, *, compute_dtype):
    # One batch tile per grid step: two MXU matmuls + VPU bias/ReLU.
    x = x_ref[...]
    if compute_dtype is not None and x.dtype != compute_dtype:
        x = x.astype(compute_dtype)          # in-kernel cast: hidden under DMA
    h = jnp.dot(x, w1_ref[...], preferred_element_type=jnp.float32) + b1_ref[...]
    h = jnp.maximum(h, 0.0)                  # bias + ReLU in f32
    y = jnp.dot(h.astype(w2_ref.dtype), w2_ref[...],
                preferred_element_type=jnp.float32) + b2_ref[...]
    o_ref[...] = y.astype(o_ref.dtype)


def downstream_model_forward(x, w1, b1, w2, b2, *, max_tm=2048, compute_dtype=None,
                             out_dtype=jnp.float32):
    """Pallas equivalent of DownstreamModel.forward.

    x:  (B, input_dim)
    w1: (input_dim, hidden)   -- pre-transposed vs. torch nn.Linear.weight
    b1: (hidden,) or (1, hidden)
    w2: (hidden, output_dim)
    b2: (output_dim,) or (1, output_dim)
    returns (B, output_dim) in out_dtype (default float32)
    """
    B, input_dim = x.shape
    hidden = w1.shape[1]
    output_dim = w2.shape[1]
    assert w1.shape[0] == input_dim and w2.shape[0] == hidden

    b1 = b1.reshape(1, hidden).astype(jnp.float32)
    b2 = b2.reshape(1, output_dim).astype(jnp.float32)

    # hidden is N of matmul-1 and K of matmul-2: keep it lane-aligned.  Weight-only
    # zero padding is exact (relu(0 + 0) = 0 contributes nothing through W2's
    # zero-padded rows) and costs nothing per batch row.
    if hidden % _LANE:
        hp = _round_up(hidden, _LANE)
        w1 = jnp.pad(w1, ((0, 0), (0, hp - hidden)))
        b1 = jnp.pad(b1, ((0, 0), (0, hp - hidden)))
        w2 = jnp.pad(w2, ((0, hp - hidden), (0, 0)))
        hidden = hp

    if compute_dtype is not None:
        # Only the (tiny, VMEM-resident) weights are cast here; x is cast in-kernel.
        w1 = w1.astype(compute_dtype)
        w2 = w2.astype(compute_dtype)

    # ---- Batch (row) tiling --------------------------------------------------
    itemsize = x.dtype.itemsize
    sub = _SUBLANE * max(1, 4 // itemsize)       # 8 (f32) / 16 (bf16) / 32 (int8)

    # VMEM-aware cap: x + out double-buffered plus the f32 h temp per tile.
    row_bytes = (2 * input_dim * itemsize
                 + 2 * _round_up(output_dim, _LANE) * 4
                 + hidden * 4)
    tm_cap = max(sub, (20 * 1024 * 1024 // row_bytes) // sub * sub)

    if B <= sub:
        tm = B                                   # one full-extent block
    else:
        n_tiles = max(2, pl.cdiv(B, max_tm))     # >=2 tiles so both v7x TCs work
        tm = _round_up(pl.cdiv(B, n_tiles), sub)
        tm = min(tm, _round_up(max_tm, sub), tm_cap)
    num_tiles = pl.cdiv(B, tm)

    flops = 2 * B * hidden * (input_dim + output_dim)
    bytes_accessed = (x.size * itemsize
                      + w1.size * w1.dtype.itemsize + b1.size * 4
                      + w2.size * w2.dtype.itemsize + b2.size * 4
                      + B * output_dim * jnp.dtype(out_dtype).itemsize)

    kernel = functools.partial(_mlp_kernel, compute_dtype=compute_dtype)

    # TODO(synk): resident W1/b1/W2/b2 could use pipeline_mode=pl.Buffered(1) to
    # halve their VMEM; skipped to keep the call maximally portable.
    out = pl.pallas_call(
        kernel,
        out_shape=jax.ShapeDtypeStruct((B, output_dim), out_dtype),
        grid=(num_tiles,),
        in_specs=[
            pl.BlockSpec((tm, input_dim), lambda i: (i, 0)),       # x: streamed
            pl.BlockSpec((input_dim, hidden), lambda i: (0, 0)),   # W1: resident
            pl.BlockSpec((1, hidden), lambda i: (0, 0)),           # b1: resident
            pl.BlockSpec((hidden, output_dim), lambda i: (0, 0)),  # W2: resident
            pl.BlockSpec((1, output_dim), lambda i: (0, 0)),       # b2: resident
        ],
        out_specs=pl.BlockSpec((tm, output_dim), lambda i: (i, 0)),
        compiler_params=pltpu.CompilerParams(
            dimension_semantics=("parallel",),   # batch tiles shard across TCs on v7x
            vmem_limit_bytes=32 * 1024 * 1024,
        ),
        cost_estimate=pl.CostEstimate(
            flops=flops, transcendentals=0, bytes_accessed=bytes_accessed),
    )(x, w1, b1, w2, b2)

    return out


def init_params(key, input_dim, output_dim, hidden=256):
    # Deterministic synthetic init (uniform, roughly matching nn.Linear scale).
    k1, k2, k3, k4 = jax.random.split(key, 4)
    s1 = 1.0 / jnp.sqrt(input_dim)
    s2 = 1.0 / jnp.sqrt(hidden)
    w1 = jax.random.uniform(k1, (input_dim, hidden), jnp.float32, -s1, s1)
    b1 = jax.random.uniform(k2, (1, hidden), jnp.float32, -s1, s1)
    w2 = jax.random.uniform(k3, (hidden, output_dim), jnp.float32, -s2, s2)
    b2 = jax.random.uniform(k4, (1, output_dim), jnp.float32, -s2, s2)
    return w1, b1, w2, b2


def _ref(x, w1, b1, w2, b2):
    hi = jax.lax.Precision.HIGHEST
    h = jnp.maximum(jnp.dot(x, w1, precision=hi) + b1, 0.0)
    return jnp.dot(h, w2, precision=hi) + b2


if __name__ == "__main__":
    key = jax.random.PRNGKey(0)
    kx, kp = jax.random.split(key)

    # Small demo sizes: input_dim lane-dense (128), awkward 16-wide head, hidden=256.
    batch, input_dim, output_dim = 8, 128, 16
    x = jax.random.normal(kx, (batch, input_dim), jnp.float32)
    w1, b1, w2, b2 = init_params(kp, input_dim, output_dim)

    # 1) f32 path, single tile.
    out = jax.block_until_ready(downstream_model_forward(x, w1, b1, w2, b2))
    assert out.shape == (batch, output_dim)
    assert jnp.allclose(out, _ref(x, w1, b1, w2, b2), atol=2e-3, rtol=2e-3)

    # 2) Multi-tile grid with a ragged last batch tile (B=600 -> 2 tiles of 304).
    big_b = 600
    x_big = jax.random.normal(kx, (big_b, input_dim), jnp.float32)
    out_big = jax.block_until_ready(downstream_model_forward(x_big, w1, b1, w2, b2))
    assert out_big.shape == (big_b, output_dim)
    assert jnp.allclose(out_big, _ref(x_big, w1, b1, w2, b2), atol=2e-3, rtol=2e-3)

    # 3) bf16 MXU operands (weights cast in wrapper, x cast in-kernel), f32 accum.
    out_bf16 = jax.block_until_ready(
        downstream_model_forward(x_big, w1, b1, w2, b2, compute_dtype=jnp.bfloat16))
    assert jnp.allclose(out_bf16, _ref(x_big, w1, b1, w2, b2), atol=1e-1, rtol=5e-2)

    # 4) Non-lane-aligned feature dims (full-extent blocks, no feature padding of x).
    b4, in4, out4 = 33, 100, 10
    x4 = jax.random.normal(kx, (b4, in4), jnp.float32)
    p4 = init_params(kp, in4, out4)
    out4_ = jax.block_until_ready(downstream_model_forward(x4, *p4))
    assert out4_.shape == (b4, out4)
    assert jnp.allclose(out4_, _ref(x4, *p4), atol=2e-3, rtol=2e-3)

    print("KERNEL_OK")
</pallas_src>

<mosaic_0001>
module attributes {stable_mosaic.version = 11 : i64} {
  func.func @_mlp_kernel(%arg0: i32, %arg1: memref<8x128xf32, #tpu.memory_space<vmem>>, %arg2: memref<128x256xf32, #tpu.memory_space<vmem>>, %arg3: memref<1x256xf32, #tpu.memory_space<vmem>>, %arg4: memref<256x16xf32, #tpu.memory_space<vmem>>, %arg5: memref<1x16xf32, #tpu.memory_space<vmem>>, %arg6: memref<8x16xf32, #tpu.memory_space<vmem>>) attributes {dimension_semantics = [#tpu.dimension_semantics<parallel>], iteration_bounds = array<i64: 1>, scalar_prefetch = 0 : i64, scratch_operands = 0 : i64, tpu.core_type = #tpu.core_type<tc>, window_params = [{transform_indices = @transform_0, window_bounds = array<i64: 8, 128>}, {pipeline_mode = #tpu.pipeline_mode<synchronous>, transform_indices = @transform_1, window_bounds = array<i64: 128, 256>}, {pipeline_mode = #tpu.pipeline_mode<synchronous>, transform_indices = @transform_2, window_bounds = array<i64: 1, 256>}, {pipeline_mode = #tpu.pipeline_mode<synchronous>, transform_indices = @transform_3, window_bounds = array<i64: 256, 16>}, {pipeline_mode = #tpu.pipeline_mode<synchronous>, transform_indices = @transform_4, window_bounds = array<i64: 1, 16>}, {transform_indices = @transform_5, window_bounds = array<i64: 8, 16>}]} {
    %c0 = arith.constant 0 : index
    %c0_0 = arith.constant 0 : index
    %0 = vector.load %arg1[%c0, %c0_0] : memref<8x128xf32, #tpu.memory_space<vmem>>, vector<8x128xf32>
    %c0_1 = arith.constant 0 : index
    %c0_2 = arith.constant 0 : index
    %1 = vector.load %arg2[%c0_1, %c0_2] : memref<128x256xf32, #tpu.memory_space<vmem>>, vector<128x256xf32>
    %cst = arith.constant dense<0.000000e+00> : vector<8x256xf32>
    %2 = tpu.matmul %0, %1, %cst {dimension_numbers = #tpu.dot_dimension_numbers<[1], [0], [0], [1], [0, 0, 1, 1], [], []>} : vector<8x128xf32>, vector<128x256xf32>, vector<8x256xf32> -> vector<8x256xf32>
    %c0_3 = arith.constant 0 : index
    %c0_4 = arith.constant 0 : index
    %3 = vector.load %arg3[%c0_3, %c0_4] : memref<1x256xf32, #tpu.memory_space<vmem>>, vector<1x256xf32>
    %4 = vector.broadcast %3 : vector<1x256xf32> to vector<8x256xf32>
    %5 = arith.addf %2, %4 : vector<8x256xf32>
    %cst_5 = arith.constant 0.000000e+00 : f32
    %6 = vector.broadcast %cst_5 : f32 to vector<8x256xf32>
    %7 = arith.maximumf %5, %6 : vector<8x256xf32>
    %c0_6 = arith.constant 0 : index
    %c0_7 = arith.constant 0 : index
    %8 = vector.load %arg4[%c0_6, %c0_7] : memref<256x16xf32, #tpu.memory_space<vmem>>, vector<256x16xf32>
    %cst_8 = arith.constant dense<0.000000e+00> : vector<8x16xf32>
    %9 = tpu.matmul %7, %8, %cst_8 {dimension_numbers = #tpu.dot_dimension_numbers<[1], [0], [0], [1], [0, 0, 1, 1], [], []>} : vector<8x256xf32>, vector<256x16xf32>, vector<8x16xf32> -> vector<8x16xf32>
    %c0_9 = arith.constant 0 : index
    %c0_10 = arith.constant 0 : index
    %10 = vector.load %arg5[%c0_9, %c0_10] : memref<1x16xf32, #tpu.memory_space<vmem>>, vector<1x16xf32>
    %11 = vector.broadcast %10 : vector<1x16xf32> to vector<8x16xf32>
    %12 = arith.addf %9, %11 : vector<8x16xf32>
    %c0_11 = arith.constant 0 : index
    %c0_12 = arith.constant 0 : index
    %13 = vector.load %arg6[%c0_11, %c0_12] : memref<8x16xf32, #tpu.memory_space<vmem>>, vector<8x16xf32>
    tpu.vector_store %arg6[%c0_11, %c0_12], %12 {strides = array<i32>} : memref<8x16xf32, #tpu.memory_space<vmem>>, vector<8x16xf32>,
    return
  }
  func.func @transform_0(%arg0: i32) -> (i32, i32) {
    %c0_i32 = arith.constant 0 : i32
    %c0_i32_0 = arith.constant 0 : i32
    return %arg0, %c0_i32 : i32, i32
  }
  func.func @transform_1(%arg0: i32) -> (i32, i32) {
    %c0_i32 = arith.constant 0 : i32
    %c0_i32_0 = arith.constant 0 : i32
    %c0_i32_1 = arith.constant 0 : i32
    return %c0_i32, %c0_i32_0 : i32, i32
  }
  func.func @transform_2(%arg0: i32) -> (i32, i32) {
    %c0_i32 = arith.constant 0 : i32
    %c0_i32_0 = arith.constant 0 : i32
    %c0_i32_1 = arith.constant 0 : i32
    return %c0_i32, %c0_i32_0 : i32, i32
  }
  func.func @transform_3(%arg0: i32) -> (i32, i32) {
    %c0_i32 = arith.constant 0 : i32
    %c0_i32_0 = arith.constant 0 : i32
    %c0_i32_1 = arith.constant 0 : i32
    return %c0_i32, %c0_i32_0 : i32, i32
  }
  func.func @transform_4(%arg0: i32) -> (i32, i32) {
    %c0_i32 = arith.constant 0 : i32
    %c0_i32_0 = arith.constant 0 : i32
    %c0_i32_1 = arith.constant 0 : i32
    return %c0_i32, %c0_i32_0 : i32, i32
  }
  func.func @transform_5(%arg0: i32) -> (i32, i32) {
    %c0_i32 = arith.constant 0 : i32
    %c0_i32_0 = arith.constant 0 : i32
    return %arg0, %c0_i32 : i32, i32
  }
}

</mosaic_0001>

<llo_original>
// kernel: tpu_custom_call.1
$region0: #{tpu_custom_call.1}
  #allocation0 [shape = 'u32[]', space=smem, size = 0x4, offset = 0x4, fixed_abs, tag = 'smem constant byte address 0x4 - core index']
  #allocation1 [shape = 'u32[144,128]{1,0:T(1,128)}', space=vmem, size = 0x12000, scoped, tag = 'internal scratch']
  %s0 = inlined_call_operand.vmem [shape: f32[8,128], index: 0, kind: input, shape index: {}]
  %s1 = inlined_call_operand.vmem [shape: f32[128,256], index: 1, kind: input, shape index: {}]
  %s2 = inlined_call_operand.vmem [shape: f32[1,256], index: 2, kind: input, shape index: {}]
  %s3 = inlined_call_operand.vmem [shape: f32[256,16], index: 3, kind: input, shape index: {}]
  %s4 = inlined_call_operand.vmem [shape: f32[1,16], index: 4, kind: input, shape index: {}]
  %s5 = inlined_call_operand.hbm [shape: f32[8,16], index: 5, kind: output, shape index: {}]
  %s6 = sld [smem:[#allocation0]]
  $region30: #{tpu_custom_call.1} parent=0
    _
  %s8 = ssub.s32 1, %s6
  %s9 = scalar_select 0, %s8, %s6
  $region1: #{tpu_custom_call.1} parent=0
    #allocation2 [shape = 'u8[4096]{0}', space=vmem, size = 0x1000, scoped, tag = 'output window, operand 0, single buffered']
    #allocation3 [shape = 's32[1]{0}', space=sflag, size = 0x4, scoped, tag = 'scoped memory for tpu_custom_call.1']
    %10 = vsyncpa [#allocation3], 0
    // Predicated region
    $region2: #{tpu_custom_call.1} parent=1 // pred_check
      _
    $region3: #{tpu_custom_call.1} parent=1 // pred_check_branch
      %12 = sbr.rel (0) target = $region5
    $region4: #{tpu_custom_call.1} parent=1 // pred_region
      _
    $region5: #{tpu_custom_call.1} parent=1 // pred_fallthru
      _
    // Predicated region
    $region6: #{tpu_custom_call.1} parent=1 // pred_check
      _
    $region7: #{tpu_custom_call.1} parent=1 // pred_check_branch
      %14 = sbr.rel (0) target = $region9
    $region8: #{tpu_custom_call.1} parent=1 // pred_region
      _
    $region9: #{tpu_custom_call.1} parent=1 // pred_fallthru
      _
    // Predicated region
    $region10: #{tpu_custom_call.1} parent=1 // pred_check
      _
    $region11: #{tpu_custom_call.1} parent=1 // pred_check_branch
      %16 = sbr.rel (0) target = $region13
    $region12: #{tpu_custom_call.1} parent=1 // pred_region
      _
    $region13: #{tpu_custom_call.1} parent=1 // pred_fallthru
      _
    // Predicated region
    $region14: #{tpu_custom_call.1} parent=1 // pred_check
      _
    $region15: #{tpu_custom_call.1} parent=1 // pred_check_branch
      %18 = sbr.rel (0) target = $region17
    $region16: #{tpu_custom_call.1} parent=1 // pred_region
      _
    $region17: #{tpu_custom_call.1} parent=1 // pred_fallthru
      _
    // Predicated region
    $region18: #{tpu_custom_call.1} parent=1 // pred_check
      _
    $region19: #{tpu_custom_call.1} parent=1 // pred_check_branch
      %20 = sbr.rel (0) target = $region21
    $region20: #{tpu_custom_call.1} parent=1 // pred_region
      _
    $region21: #{tpu_custom_call.1} parent=1 // pred_fallthru
      _
    %v21 = vld [vmem:[%s0] sm:$0xff]
    %v22 = vld [vmem:[%s1] sm:$0xff]
    %v23 = vld [vmem:[%s1 + $0x8] sm:$0xff]
    %v24 = vld [vmem:[%s1 + $0x10] sm:$0xff]
    %v25 = vld [vmem:[%s1 + $0x18] sm:$0xff]
    %v26 = vld [vmem:[%s1 + $0x20] sm:$0xff]
    %v27 = vld [vmem:[%s1 + $0x28] sm:$0xff]
    %v28 = vld [vmem:[%s1 + $0x30] sm:$0xff]
    %v29 = vld [vmem:[%s1 + $0x38] sm:$0xff]
    %v30 = vld [vmem:[%s1 + $0x40] sm:$0xff]
    %v31 = vld [vmem:[%s1 + $0x48] sm:$0xff]
    %v32 = vld [vmem:[%s1 + $0x50] sm:$0xff]
    %v33 = vld [vmem:[%s1 + $0x58] sm:$0xff]
    %v34 = vld [vmem:[%s1 + $0x60] sm:$0xff]
    %v35 = vld [vmem:[%s1 + $0x68] sm:$0xff]
    %v36 = vld [vmem:[%s1 + $0x70] sm:$0xff]
    %v37 = vld [vmem:[%s1 + $0x78] sm:$0xff]
    %v38 = vld [vmem:[%s1 + $0x80] sm:$0xff]
    %v39 = vld [vmem:[%s1 + $0x88] sm:$0xff]
    %v40 = vld [vmem:[%s1 + $0x90] sm:$0xff]
    %v41 = vld [vmem:[%s1 + $0x98] sm:$0xff]
    %v42 = vld [vmem:[%s1 + $0xa0] sm:$0xff]
    %v43 = vld [vmem:[%s1 + $0xa8] sm:$0xff]
    %v44 = vld [vmem:[%s1 + $0xb0] sm:$0xff]
    %v45 = vld [vmem:[%s1 + $0xb8] sm:$0xff]
    %v46 = vld [vmem:[%s1 + $0xc0] sm:$0xff]
    %v47 = vld [vmem:[%s1 + $0xc8] sm:$0xff]
    %v48 = vld [vmem:[%s1 + $0xd0] sm:$0xff]
    %v49 = vld [vmem:[%s1 + $0xd8] sm:$0xff]
    %v50 = vld [vmem:[%s1 + $0xe0] sm:$0xff]
    %v51 = vld [vmem:[%s1 + $0xe8] sm:$0xff]
    %v52 = vld [vmem:[%s1 + $0xf0] sm:$0xff]
    %v53 = vld [vmem:[%s1 + $0xf8] sm:$0xff]
    %v54 = vld [vmem:[%s2] sm:$0x3]
    %v56 = vlaneseq
    %v57 = vshrl.u32 %v56, 7
    %v58 = vsub.s32 0, %v57
    %v59 = vrot.slane %v54, %v58
    %v60 = vlaneseq
    %v61 = vshrl.u32 %v60, 7
    %v62 = vsub.s32 1, %v61
    %v63 = vrot.slane %v54, %v62
    %66 = vmatprep.subr.mxu0 %v53
    %67 = vmatpush1.msra.mxu0 %v52
    %68 = vmatprep.subr.mxu0 %v51
    %69 = vmatpush1.msra.mxu0 %v50
    %70 = vmatprep.subr.mxu0 %v49
    %71 = vmatpush1.msra.mxu0 %v48
    %72 = vmatprep.subr.mxu0 %v47
    %73 = vmatpush1.msra.mxu0 %v46
    %74 = vmatprep.subr.mxu0 %v45
    %75 = vmatpush1.msra.mxu0 %v44
    %76 = vmatprep.subr.mxu0 %v43
    %77 = vmatpush1.msra.mxu0 %v42
    %78 = vmatprep.subr.mxu0 %v41
    %79 = vmatpush1.msra.mxu0 %v40
    %80 = vmatprep.subr.mxu0 %v39
    %81 = vmatpush1.msra.mxu0 %v38
    %82 = vmatprep.subr.mxu0 %v37
    %83 = vmatpush1.msra.mxu0 %v36
    %84 = vmatprep.subr.mxu0 %v35
    %85 = vmatpush1.msra.mxu0 %v34
    %86 = vmatprep.subr.mxu0 %v33
    %87 = vmatpush1.msra.mxu0 %v32
    %88 = vmatprep.subr.mxu0 %v31
    %89 = vmatpush1.msra.mxu0 %v30
    %90 = vmatprep.subr.mxu0 %v29
    %91 = vmatpush1.msra.mxu0 %v28
    %92 = vmatprep.subr.mxu0 %v27
    %93 = vmatpush1.msra.mxu0 %v26
    %94 = vmatprep.subr.mxu0 %v25
    %95 = vmatpush1.msra.mxu0 %v24
    %96 = vmatprep.subr.mxu0 %v23
    %97 = vmatpush1.msra.mxu0 %v22
    %98 = vmatprep.subr.mxu0 0.0
    %99 = vmatpush2.msra.mxu0 0.0
    %100 = vmatprep.subr.mxu0 0.0
    %101 = vmatpush2.msra.mxu0 0.0
    %102 = vmatprep.subr.mxu0 0.0
    %103 = vmatpush2.msra.mxu0 0.0
    %104 = vmatprep.subr.mxu0 0.0
    %105 = vmatpush2.msra.mxu0 0.0
    %106 = vmatprep.subr.mxu0 0.0
    %107 = vmatpush2.msra.mxu0 0.0
    %108 = vmatprep.subr.mxu0 0.0
    %109 = vmatpush2.msra.mxu0 0.0
    %110 = vmatprep.subr.mxu0 0.0
    %111 = vmatpush2.msra.mxu0 0.0
    %112 = vmatprep.subr.mxu0 0.0
    %113 = vmatpush2.msra.mxu0 0.0
    %114 = vmatprep.subr.mxu0 0.0
    %115 = vmatpush2.msra.mxu0 0.0
    %116 = vmatprep.subr.mxu0 0.0
    %117 = vmatpush2.msra.mxu0 0.0
    %118 = vmatprep.subr.mxu0 0.0
    %119 = vmatpush2.msra.mxu0 0.0
    %120 = vmatprep.subr.mxu0 0.0
    %121 = vmatpush2.msra.mxu0 0.0
    %122 = vmatprep.subr.mxu0 0.0
    %123 = vmatpush2.msra.mxu0 0.0
    %124 = vmatprep.subr.mxu0 0.0
    %125 = vmatpush2.msra.mxu0 0.0
    %126 = vmatprep.subr.mxu0 0.0
    %127 = vmatpush2.msra.mxu0 0.0
    %128 = vmatprep.subr.mxu0 0.0
    %129 = vmatpush2.msra.mxu0 0.0
    %130 = vmatprep.mubr.f32.mxu0 0.0
    %131 = vmatmul.mubr.f32.gmra.mxu0 %v21
    %v132 = vpop.f32.mrf.mxu0
    %v133 = vadd.f32 %v59, %v132
    %v134 = vpop.f32.mrf.mxu0
    %v135 = vadd.f32 %v63, %v134
    %136 = vdwg.mxu0
    %v137 = vmax.f32 %v133, 0.0
    %v138 = vmax.f32 %v135, 0.0
    %v139 = vld [vmem:[%s3] sm:$0xff]
    %v140 = vld [vmem:[%s3 + $0x8] sm:$0xff]
    %v141 = vld [vmem:[%s3 + $0x10] sm:$0xff]
    %v142 = vld [vmem:[%s3 + $0x18] sm:$0xff]
    %v143 = vld [vmem:[%s3 + $0x20] sm:$0xff]
    %v144 = vld [vmem:[%s3 + $0x28] sm:$0xff]
    %v145 = vld [vmem:[%s3 + $0x30] sm:$0xff]
    %v146 = vld [vmem:[%s3 + $0x38] sm:$0xff]
    %v147 = vld [vmem:[%s3 + $0x40] sm:$0xff]
    %v148 = vld [vmem:[%s3 + $0x48] sm:$0xff]
    %v149 = vld [vmem:[%s3 + $0x50] sm:$0xff]
    %v150 = vld [vmem:[%s3 + $0x58] sm:$0xff]
    %v151 = vld [vmem:[%s3 + $0x60] sm:$0xff]
    %v152 = vld [vmem:[%s3 + $0x68] sm:$0xff]
    %v153 = vld [vmem:[%s3 + $0x70] sm:$0xff]
    %v154 = vld [vmem:[%s3 + $0x78] sm:$0xff]
    %v155 = vld [vmem:[%s3 + $0x80] sm:$0xff]
    %v156 = vld [vmem:[%s3 + $0x88] sm:$0xff]
    %v157 = vld [vmem:[%s3 + $0x90] sm:$0xff]
    %v158 = vld [vmem:[%s3 + $0x98] sm:$0xff]
    %v159 = vld [vmem:[%s3 + $0xa0] sm:$0xff]
    %v160 = vld [vmem:[%s3 + $0xa8] sm:$0xff]
    %v161 = vld [vmem:[%s3 + $0xb0] sm:$0xff]
    %v162 = vld [vmem:[%s3 + $0xb8] sm:$0xff]
    %v163 = vld [vmem:[%s3 + $0xc0] sm:$0xff]
    %v164 = vld [vmem:[%s3 + $0xc8] sm:$0xff]
    %v165 = vld [vmem:[%s3 + $0xd0] sm:$0xff]
    %v166 = vld [vmem:[%s3 + $0xd8] sm:$0xff]
    %v167 = vld [vmem:[%s3 + $0xe0] sm:$0xff]
    %v168 = vld [vmem:[%s3 + $0xe8] sm:$0xff]
    %v169 = vld [vmem:[%s3 + $0xf0] sm:$0xff]
    %v170 = vld [vmem:[%s3 + $0xf8] sm:$0xff]
    %v171 = vld [vmem:[%s4] sm:$0x1]
    %v173 = vlaneseq
    %v174 = vshrl.u32 %v173, 7
    %v175 = vsub.s32 0, %v174
    %v176 = vrot.slane %v171, %v175
    %178 = vmatprep.subr.mxu0 0.0
    %179 = vmatpush1.msra.mxu0 %v154
    %180 = vmatprep.subr.mxu0 0.0
    %181 = vmatpush1.msra.mxu0 %v153
    %182 = vmatprep.subr.mxu0 0.0
    %183 = vmatpush1.msra.mxu0 %v152
    %184 = vmatprep.subr.mxu0 0.0
    %185 = vmatpush1.msra.mxu0 %v151
    %186 = vmatprep.subr.mxu0 0.0
    %187 = vmatpush1.msra.mxu0 %v150
    %188 = vmatprep.subr.mxu0 0.0
    %189 = vmatpush1.msra.mxu0 %v149
    %190 = vmatprep.subr.mxu0 0.0
    %191 = vmatpush1.msra.mxu0 %v148
    %192 = vmatprep.subr.mxu0 0.0
    %193 = vmatpush1.msra.mxu0 %v147
    %194 = vmatprep.subr.mxu0 0.0
    %195 = vmatpush1.msra.mxu0 %v146
    %196 = vmatprep.subr.mxu0 0.0
    %197 = vmatpush1.msra.mxu0 %v145
    %198 = vmatprep.subr.mxu0 0.0
    %199 = vmatpush1.msra.mxu0 %v144
    %200 = vmatprep.subr.mxu0 0.0
    %201 = vmatpush1.msra.mxu0 %v143
    %202 = vmatprep.subr.mxu0 0.0
    %203 = vmatpush1.msra.mxu0 %v142
    %204 = vmatprep.subr.mxu0 0.0
    %205 = vmatpush1.msra.mxu0 %v141
    %206 = vmatprep.subr.mxu0 0.0
    %207 = vmatpush1.msra.mxu0 %v140
    %208 = vmatprep.subr.mxu0 0.0
    %209 = vmatpush1.msra.mxu0 %v139
    %210 = vmatprep.subr.mxu0 0.0
    %211 = vmatpush2.msra.mxu0 %v170
    %212 = vmatprep.subr.mxu0 0.0
    %213 = vmatpush2.msra.mxu0 %v169
    %214 = vmatprep.subr.mxu0 0.0
    %215 = vmatpush2.msra.mxu0 %v168
    %216 = vmatprep.subr.mxu0 0.0
    %217 = vmatpush2.msra.mxu0 %v167
    %218 = vmatprep.subr.mxu0 0.0
    %219 = vmatpush2.msra.mxu0 %v166
    %220 = vmatprep.subr.mxu0 0.0
    %221 = vmatpush2.msra.mxu0 %v165
    %222 = vmatprep.subr.mxu0 0.0
    %223 = vmatpush2.msra.mxu0 %v164
    %224 = vmatprep.subr.mxu0 0.0
    %225 = vmatpush2.msra.mxu0 %v163
    %226 = vmatprep.subr.mxu0 0.0
    %227 = vmatpush2.msra.mxu0 %v162
    %228 = vmatprep.subr.mxu0 0.0
    %229 = vmatpush2.msra.mxu0 %v161
    %230 = vmatprep.subr.mxu0 0.0
    %231 = vmatpush2.msra.mxu0 %v160
    %232 = vmatprep.subr.mxu0 0.0
    %233 = vmatpush2.msra.mxu0 %v159
    %234 = vmatprep.subr.mxu0 0.0
    %235 = vmatpush2.msra.mxu0 %v158
    %236 = vmatprep.subr.mxu0 0.0
    %237 = vmatpush2.msra.mxu0 %v157
    %238 = vmatprep.subr.mxu0 0.0
    %239 = vmatpush2.msra.mxu0 %v156
    %240 = vmatprep.subr.mxu0 0.0
    %241 = vmatpush2.msra.mxu0 %v155
    %242 = vmatprep.mubr.f32.mxu0 %v138
    %243 = vmatmul.mubr.f32.gmra.mxu0 %v137
    %v244 = vpop.f32.mrf.mxu0
    %v245 = vadd.f32 %v176, %v244
    %v246 = vpop.f32.mrf.mxu0
    %247 = vdwg.mxu0
    %vm248 = vcmask 130048
    %249 = vst.msk [vmem:[#allocation2] sm:$0xff] %vm248, %v245
    // Predicated region
    $region22: #{tpu_custom_call.1} parent=1 // pred_check
      _
    $region23: #{tpu_custom_call.1} parent=1 // pred_check_branch
      %251 = sbr.rel (0) target = $region25
    $region24: #{tpu_custom_call.1} parent=1 // pred_region
      %s253 = ssub.s32 128, 128
      %254 = vsyncadd [#allocation3], %s253
      %s256 = sshll.u32 [#allocation2], 4
      %s257 = int_to_ptr.vmem [resolvable:$true] %s256
      %259 = dma.vmem_to_hbm [thread:$0]  %s257, 128, %s5, [#allocation3]
    $region25: #{tpu_custom_call.1} parent=1 // pred_fallthru
      _
    // Predicated region
    $region26: #{tpu_custom_call.1} parent=1 // pred_check
      _
    $region27: #{tpu_custom_call.1} parent=1 // pred_check_branch
      %261 = sbr.rel (0) target = $region29
    $region28: #{tpu_custom_call.1} parent=1 // pred_region
      %262 = dma.done [#allocation3], 128
    $region29: #{tpu_custom_call.1} parent=1 // pred_fallthru
      _
    %263 = vsyncpa [#allocation3], 1

</llo_original>
